<compile_context>
chip_gen: v5e
topology: v5e:2x2
jax: 0.10.0
libtpu: 0.0.40
codegen_flags: <defaults>
</compile_context>

<pallas_src>
import jax
import jax.numpy as jnp
from jax.experimental import pallas as pl
from jax.experimental.pallas import tpu as pltpu


def _avg_consensus_kernel(x_ref, o_ref):
    # x_ref: (BB, T, Ct) tile; reduce over the segment axis (axis=1).
    # f32 accumulation + constant-reciprocal multiply (cheaper than divide).
    inv_t = 1.0 / x_ref.shape[1]
    x = x_ref[...].astype(jnp.float32)
    o_ref[...] = (jnp.sum(x, axis=1) * inv_t).astype(o_ref.dtype)


def _choose_c_tile(C):
    # Prefer a lane-dense (multiple-of-128) column tile when C allows it;
    # otherwise take the full C extent (legal as a full-dim block).
    for cand in (1024, 512, 256, 128):
        if C > cand and C % cand == 0:
            return cand
    return C


def _choose_batch_tile(B, T, c_tile, itemsize, target_tile_bytes):
    # Pick rows-per-step so the input tile is ~target_tile_bytes.
    rows = max(1, target_tile_bytes // max(1, T * c_tile * itemsize))
    if rows >= B:
        return B
    # Output block is (BB, c_tile): BB must be a multiple of 8 (sublane) or == B.
    bb = max(8, (rows // 8) * 8)
    return bb if bb < B else B


def segment_consensus_avg(x, *, target_tile_bytes=4 * 1024 * 1024):
    """Mean over dim=1 with keepdim=True, computed by a Pallas streaming reduction."""
    B, T, C = x.shape
    c_tile = _choose_c_tile(C)
    bb = _choose_batch_tile(B, T, c_tile, jnp.dtype(x.dtype).itemsize,
                            target_tile_bytes)

    out_2d = pl.pallas_call(
        _avg_consensus_kernel,
        out_shape=jax.ShapeDtypeStruct((B, C), x.dtype),
        grid_spec=pltpu.PrefetchScalarGridSpec(
            num_scalar_prefetch=0,
            grid=(pl.cdiv(B, bb), pl.cdiv(C, c_tile)),
            in_specs=[pl.BlockSpec((bb, T, c_tile), lambda b, c: (b, 0, c))],
            out_specs=pl.BlockSpec((bb, c_tile), lambda b, c: (b, c)),
        ),
        compiler_params=pltpu.CompilerParams(
            dimension_semantics=("parallel", "parallel")),
    )(x)
    # keepdim reshape is free layout plumbing outside the kernel.
    return out_2d.reshape(B, 1, C)


class ConsensusModule:
    """JAX/Pallas port of FaZe ConsensusModule (forward only)."""

    def __init__(self, consensus_type, dim=1):
        self.consensus_type = consensus_type if consensus_type != 'rnn' else 'identity'
        self.dim = dim
        # Only dim=1 on (B, T, C) inputs is supported, matching standard TSN usage.
        assert self.dim == 1, "This Pallas port supports dim=1 (segment axis)."

    def __call__(self, x):
        if self.consensus_type == 'avg':
            return segment_consensus_avg(x)
        elif self.consensus_type == 'identity':
            # Identity is a true no-op: return x directly instead of burning an
            # HBM read + write on a bit-identical copy kernel.
            return x
        else:
            # matches PyTorch behavior of returning None for unknown types
            return None


if __name__ == "__main__":
    key = jax.random.PRNGKey(0)

    # Small TSN-like shape: (batch=2, num_segments=8, num_classes=32).
    x_small = jax.random.normal(key, (2, 8, 32), dtype=jnp.float32)

    mod_avg = ConsensusModule('avg', dim=1)
    out_avg = jax.block_until_ready(mod_avg(x_small))
    ref_avg = jnp.mean(x_small, axis=1, keepdims=True)
    assert out_avg.shape == (2, 1, 32)
    assert jnp.allclose(out_avg, ref_avg, atol=1e-5, rtol=1e-5)

    # Slightly larger shape exercises the lane-dense C-tiled 2-D grid path.
    x_med = jax.random.normal(jax.random.PRNGKey(0), (16, 8, 256), dtype=jnp.float32)
    out_med = jax.block_until_ready(segment_consensus_avg(x_med))
    ref_med = jnp.mean(x_med, axis=1, keepdims=True)
    assert out_med.shape == (16, 1, 256)
    assert jnp.allclose(out_med, ref_med, atol=1e-5, rtol=1e-5)

    # 'identity' (and 'rnn' -> identity): pure pass-through, no kernel launch.
    mod_id = ConsensusModule('rnn', dim=1)
    out_id = jax.block_until_ready(mod_id(x_small))
    assert out_id.shape == x_small.shape
    assert jnp.allclose(out_id, x_small)

    print("KERNEL_OK")
</pallas_src>

<mosaic_0001>
module attributes {stable_mosaic.version = 11 : i64} {
  func.func @_avg_consensus_kernel(%arg0: i32, %arg1: i32, %arg2: memref<2x8x32xf32, #tpu.memory_space<vmem>>, %arg3: memref<2x32xf32, #tpu.memory_space<vmem>>) attributes {dimension_semantics = [#tpu.dimension_semantics<parallel>, #tpu.dimension_semantics<parallel>], iteration_bounds = array<i64: 1, 1>, scalar_prefetch = 0 : i64, scratch_operands = 0 : i64, tpu.core_type = #tpu.core_type<tc>, window_params = [{transform_indices = @transform_0, window_bounds = array<i64: 2, 8, 32>}, {transform_indices = @transform_1, window_bounds = array<i64: 2, 32>}]} {
    %c0 = arith.constant 0 : index
    %c0_0 = arith.constant 0 : index
    %c0_1 = arith.constant 0 : index
    %0 = vector.load %arg2[%c0, %c0_0, %c0_1] : memref<2x8x32xf32, #tpu.memory_space<vmem>>, vector<2x8x32xf32>
    %cst = arith.constant dense<0.000000e+00> : vector<2x32xf32>
    %1 = vector.multi_reduction <add>, %0, %cst [1] : vector<2x8x32xf32> to vector<2x32xf32>
    %cst_2 = arith.constant 1.250000e-01 : f32
    %2 = vector.broadcast %cst_2 : f32 to vector<2x32xf32>
    %3 = arith.mulf %1, %2 : vector<2x32xf32>
    %c0_3 = arith.constant 0 : index
    %c0_4 = arith.constant 0 : index
    %4 = vector.load %arg3[%c0_3, %c0_4] : memref<2x32xf32, #tpu.memory_space<vmem>>, vector<2x32xf32>
    tpu.vector_store %arg3[%c0_3, %c0_4], %3 {strides = array<i32>} : memref<2x32xf32, #tpu.memory_space<vmem>>, vector<2x32xf32>,
    return
  }
  func.func @transform_0(%arg0: i32, %arg1: i32) -> (i32, i32, i32) {
    %c0_i32 = arith.constant 0 : i32
    %c0_i32_0 = arith.constant 0 : i32
    return %arg0, %c0_i32, %arg1 : i32, i32, i32
  }
  func.func @transform_1(%arg0: i32, %arg1: i32) -> (i32, i32) {
    %c0_i32 = arith.constant 0 : i32
    return %arg0, %arg1 : i32, i32
  }
}

</mosaic_0001>

<llo_original>
// kernel: tpu_custom_call.1
$region0: #{tpu_custom_call.1}
  #allocation0 [shape = 'u32[]', space=smem, size = 0x4, offset = 0x4, fixed_abs, tag = 'smem constant byte address 0x4 - core index']
  #allocation1 [shape = 'u32[72,128]{1,0:T(1,128)}', space=vmem, size = 0x9000, scoped, tag = 'internal scratch']
  %s0 = inlined_call_operand.hbm [shape: f32[2,8,32], index: 0, kind: input, shape index: {}]
  %s1 = inlined_call_operand.hbm [shape: f32[2,32], index: 1, kind: output, shape index: {}]
  %s2 = sld [smem:[#allocation0]]
  $region18: #{tpu_custom_call.1} parent=0
    _
  %s4 = ssub.s32 1, %s2
  %s5 = scalar_select 0, %s4, %s2
  $region1: #{tpu_custom_call.1} parent=0
    #allocation2 [shape = 'u8[8192]{0}', space=vmem, size = 0x2000, scoped, tag = 'input window, operand 0, single buffered']
    #allocation3 [shape = 's32[1]{0}', space=sflag, size = 0x4, scoped, tag = 'scoped memory for tpu_custom_call.1']
    #allocation4 [shape = 's32[1]{0}', space=sflag, size = 0x4, scoped, tag = 'scoped memory for tpu_custom_call.1']
    #allocation5 [shape = 'u8[1024]{0}', space=vmem, size = 0x400, scoped, tag = 'output window, operand 0, single buffered']
    %6 = vsyncpa [#allocation3], 0
    %7 = vsyncpa [#allocation4], 0
    // Predicated region
    $region2: #{tpu_custom_call.1} parent=1 // pred_check
      _
    $region3: #{tpu_custom_call.1} parent=1 // pred_check_branch
      %9 = sbr.rel (0) target = $region5
    $region4: #{tpu_custom_call.1} parent=1 // pred_region
      %11 = vsyncadd [#allocation3], 0
      %s12 = sshll.u32 %s0, 4
      %s13 = int_to_ptr.hbm [resolvable:$true] %s12
      %s14 = sshll.u32 [#allocation2], 4
      %s15 = int_to_ptr.vmem [resolvable:$true] %s14
      %20 = dma.hbm_to_vmem [thread:$0]  %s13, 256, %s15, [#allocation3], 128, 128, 8
    $region5: #{tpu_custom_call.1} parent=1 // pred_fallthru
      _
    // Predicated region
    $region6: #{tpu_custom_call.1} parent=1 // pred_check
      _
    $region7: #{tpu_custom_call.1} parent=1 // pred_check_branch
      %22 = sbr.rel (0) target = $region9
    $region8: #{tpu_custom_call.1} parent=1 // pred_region
      %24 = dma.done [#allocation3], 256
    $region9: #{tpu_custom_call.1} parent=1 // pred_fallthru
      _
    %v25 = vld [vmem:[#allocation2] sm:$0xff]
    %v26 = vld [vmem:[#allocation2 + $0x8] sm:$0xff]
    %vm27 = vcmask 261120
    %v28 = vsel %vm27, %v25, 0.0
    %v29 = vrot.slane %v28, 4
    %v30 = vadd.f32 %v28, %v29
    %v31 = vrot.slane %v30, 2
    %v32 = vadd.f32 %v30, %v31
    %v33 = vrot.slane %v32, 1
    %v34 = vadd.f32 %v32, %v33
    %v35 = vsel %vm27, %v26, 0.0
    %v36 = vrot.slane %v35, 4
    %v37 = vadd.f32 %v35, %v36
    %v38 = vrot.slane %v37, 2
    %v39 = vadd.f32 %v37, %v38
    %v40 = vrot.slane %v39, 1
    %v41 = vadd.f32 %v39, %v40
    %v42 = vmul.f32 %v34, 0.125
    %v43 = vmul.f32 %v41, 0.125
    %vm46 = vcmask 1041409
    %v47 = vsel %vm46, %v43, %v42
    %vm49 = vcmask 254976
    %50 = vst.msk [vmem:[#allocation5] sm:$0x3] %vm49, %v47
    // Predicated region
    $region10: #{tpu_custom_call.1} parent=1 // pred_check
      _
    $region11: #{tpu_custom_call.1} parent=1 // pred_check_branch
      %52 = sbr.rel (0) target = $region13
    $region12: #{tpu_custom_call.1} parent=1 // pred_region
      %54 = vsyncadd [#allocation4], 0
      %s56 = sshll.u32 [#allocation5], 4
      %s57 = int_to_ptr.vmem [resolvable:$true] %s56
      %s58 = sshll.u32 %s1, 4
      %s59 = int_to_ptr.hbm [resolvable:$true] %s58
      %61 = dma.vmem_to_hbm [thread:$0]  %s57, 32, %s59, [#allocation4]
    $region13: #{tpu_custom_call.1} parent=1 // pred_fallthru
      _
    // Predicated region
    $region14: #{tpu_custom_call.1} parent=1 // pred_check
      _
    $region15: #{tpu_custom_call.1} parent=1 // pred_check_branch
      %63 = sbr.rel (0) target = $region17
    $region16: #{tpu_custom_call.1} parent=1 // pred_region
      %65 = dma.done [#allocation4], 32
    $region17: #{tpu_custom_call.1} parent=1 // pred_fallthru
      _
    %66 = vsyncpa [#allocation3], 1
    %67 = vsyncpa [#allocation4], 1

</llo_original>
